<compile_context>
chip_gen: v6e
topology: v6e:2x2x1
jax: 0.10.0
libtpu: 0.0.40
codegen_flags: <defaults>
</compile_context>

<pallas_src>
import functools
import math

import jax
import jax.numpy as jnp
from jax import lax
from jax.experimental import pallas as pl
from jax.experimental.pallas import tpu as pltpu

BN_EPS = 1e-5
_INV_SQRT2 = 0.7071067811865476  # 1/sqrt(2)

# Note: spec module is named FCBNReLU1D but its forward uses nn.GELU() -> exact
# (erf-based) GELU is the correct activation here, so we keep lax.erf.


def _stats_kernel(x_ref, w_ref, psum_ref, psq_ref):
    # x_ref:  (C_in, TL)   one batch element, one L tile (N axis squeezed)
    # w_ref:  (C_out, C_in) VMEM-resident across the grid
    # psum_ref / psq_ref: (1, 1, C_out, 1) per-grid-step partial statistics
    y = jnp.dot(w_ref[...], x_ref[...], preferred_element_type=jnp.float32)
    psum_ref[0, 0] = jnp.sum(y, axis=1, keepdims=True)       # (C_out, 1)
    psq_ref[0, 0] = jnp.sum(y * y, axis=1, keepdims=True)    # (C_out, 1)


def _apply_kernel(x_ref, w_ref, scale_ref, shift_ref, o_ref):
    # x_ref: (C_in, TL); w_ref: (C_out, C_in); scale/shift: (C_out, 1); o_ref: (C_out, TL)
    y = jnp.dot(w_ref[...], x_ref[...], preferred_element_type=jnp.float32)
    z = y * scale_ref[...] + shift_ref[...]                  # folded BN affine
    out = 0.5 * z * (1.0 + lax.erf(z * jnp.float32(_INV_SQRT2)))  # exact GELU
    o_ref[...] = out.astype(o_ref.dtype)


def _choose_l_tile(l, cap):
    """Largest L tile <= cap that divides L exactly (avoid partial-tile garbage
    leaking into the BN statistics)."""
    if l <= cap:
        return l
    for t in (512, 384, 256, 128):
        if t <= cap and l % t == 0:
            return t
    return l  # fallback: no L tiling (correct, but VMEM-heavy for huge odd L)


@functools.partial(jax.jit, static_argnames=("l_tile_cap",))
def fc_bn_gelu1d(x, weight, gamma, beta, *, l_tile_cap=512):
    """x: (N, C_in, L); weight: (C_out, C_in, 1); gamma/beta: (C_out,)."""
    n, c_in, l = x.shape
    c_out = weight.shape[0]
    tl = _choose_l_tile(l, l_tile_cap)
    nlt = l // tl
    m = n * l
    itemsize = jnp.dtype(x.dtype).itemsize

    # (C_out, C_in, 1) -> (C_out, C_in); match x's dtype so a bf16 x uses the bf16 MXU.
    w2d = weight[:, :, 0].astype(x.dtype)

    x_spec = pl.BlockSpec((None, c_in, tl), lambda i, j: (i, 0, j))
    w_spec = pl.BlockSpec((c_out, c_in), lambda i, j: (0, 0))      # resident
    vec_spec = pl.BlockSpec((c_out, 1), lambda i, j: (0, 0))       # resident

    # On v7x (64 MiB VMEM/TC) shrink l_tile_cap (e.g. 256) and this limit accordingly.
    cparams = pltpu.CompilerParams(
        dimension_semantics=("parallel", "parallel"),
        vmem_limit_bytes=48 * 1024 * 1024,
    )

    # ---------- pass 1: per-tile partial sum / sum-of-squares of y = W @ x ----------
    matmul_flops = 2 * m * c_in * c_out
    psum, psq = pl.pallas_call(
        _stats_kernel,
        out_shape=(
            jax.ShapeDtypeStruct((n, nlt, c_out, 1), jnp.float32),
            jax.ShapeDtypeStruct((n, nlt, c_out, 1), jnp.float32),
        ),
        grid=(n, nlt),
        in_specs=[x_spec, w_spec],
        out_specs=(
            pl.BlockSpec((1, 1, c_out, 1), lambda i, j: (i, j, 0, 0)),
            pl.BlockSpec((1, 1, c_out, 1), lambda i, j: (i, j, 0, 0)),
        ),
        compiler_params=cparams,
        cost_estimate=pl.CostEstimate(
            flops=int(matmul_flops + 3 * m * c_out),
            transcendentals=0,
            bytes_accessed=int(
                n * c_in * l * itemsize + c_out * c_in * itemsize
                + 2 * n * nlt * c_out * 4
            ),
        ),
    )(x, w2d)

    # ---------- tiny XLA glue: reduce partials, fold BN into scale/shift ----------
    tot = jnp.sum(psum[..., 0], axis=(0, 1))        # (C_out,)
    tot_sq = jnp.sum(psq[..., 0], axis=(0, 1))      # (C_out,)
    mf = jnp.float32(m)
    mean = tot / mf
    # TODO(synk): switch to centered/Welford-style accumulation if f32 cancellation
    # in E[y^2] - mean^2 becomes an issue at very large N*L; clamp guards the worst.
    var = jnp.maximum(tot_sq / mf - mean * mean, 0.0)
    rstd = lax.rsqrt(var + jnp.float32(BN_EPS))
    g32 = gamma.astype(jnp.float32)
    b32 = beta.astype(jnp.float32)
    scale = (g32 * rstd).reshape(c_out, 1)
    shift = (b32 - mean * g32 * rstd).reshape(c_out, 1)

    # ---------- pass 2: recompute tile matmul, normalize + GELU, lane-dense store ---
    out = pl.pallas_call(
        _apply_kernel,
        out_shape=jax.ShapeDtypeStruct((n, c_out, l), x.dtype),
        grid=(n, nlt),
        in_specs=[x_spec, w_spec, vec_spec, vec_spec],
        out_specs=pl.BlockSpec((None, c_out, tl), lambda i, j: (i, 0, j)),
        compiler_params=cparams,
        cost_estimate=pl.CostEstimate(
            flops=int(matmul_flops + 8 * m * c_out),
            transcendentals=int(m * c_out),
            bytes_accessed=int(
                n * c_in * l * itemsize + c_out * c_in * itemsize
                + n * c_out * l * itemsize + 2 * c_out * 4
            ),
        ),
    )(x, w2d, scale, shift)
    return out


def _reference(x, weight, gamma, beta):
    # Pure-JAX reference of the PyTorch forward (training-mode BN, exact GELU).
    y = jnp.einsum("oc,ncl->nol", weight[:, :, 0], x)
    mean = jnp.mean(y, axis=(0, 2), keepdims=True)
    var = jnp.mean((y - mean) ** 2, axis=(0, 2), keepdims=True)
    y_hat = (y - mean) * lax.rsqrt(var + BN_EPS)
    z = y_hat * gamma[None, :, None] + beta[None, :, None]
    return 0.5 * z * (1.0 + lax.erf(z / jnp.sqrt(2.0)))


def _run_case(key, n, c_in, c_out, l, l_tile_cap=512):
    k_x, k_w, k_g, k_b = jax.random.split(key, 4)
    x = jax.random.normal(k_x, (n, c_in, l), dtype=jnp.float32)
    bound = 1.0 / math.sqrt(c_in * 1)
    weight = jax.random.uniform(
        k_w, (c_out, c_in, 1), dtype=jnp.float32, minval=-bound, maxval=bound
    )
    gamma = 1.0 + 0.1 * jax.random.normal(k_g, (c_out,), dtype=jnp.float32)
    beta = 0.1 * jax.random.normal(k_b, (c_out,), dtype=jnp.float32)

    out = fc_bn_gelu1d(x, weight, gamma, beta, l_tile_cap=l_tile_cap)
    out = jax.block_until_ready(out)
    ref = _reference(x, weight, gamma, beta)
    assert out.shape == (n, c_out, l)
    assert jnp.allclose(out, ref, atol=1e-4, rtol=1e-4), (
        f"mismatch: max abs err {jnp.max(jnp.abs(out - ref))}"
    )


if __name__ == "__main__":
    key = jax.random.PRNGKey(0)
    k1, k2 = jax.random.split(key)

    # Small case consistent with the module (single L tile).
    _run_case(k1, n=2, c_in=4, c_out=8, l=16)
    # Slightly larger case exercising the (N, L-tile) grid / two-pass BN path.
    _run_case(k2, n=2, c_in=8, c_out=16, l=1024, l_tile_cap=512)

    print("KERNEL_OK")
</pallas_src>

<mosaic_0001>
module attributes {stable_mosaic.version = 11 : i64} {
  func.func @_stats_kernel(%arg0: i32, %arg1: i32, %arg2: memref<1x4x16xf32, #tpu.memory_space<vmem>>, %arg3: memref<8x4xf32, #tpu.memory_space<vmem>>, %arg4: memref<1x1x8x1xf32, #tpu.memory_space<vmem>>, %arg5: memref<1x1x8x1xf32, #tpu.memory_space<vmem>>) attributes {dimension_semantics = [#tpu.dimension_semantics<parallel>, #tpu.dimension_semantics<parallel>], iteration_bounds = array<i64: 2, 1>, scalar_prefetch = 0 : i64, scratch_operands = 0 : i64, tpu.core_type = #tpu.core_type<tc>, window_params = [{transform_indices = @transform_0, window_bounds = array<i64: 1, 4, 16>}, {pipeline_mode = #tpu.pipeline_mode<synchronous>, transform_indices = @transform_1, window_bounds = array<i64: 8, 4>}, {transform_indices = @transform_2, window_bounds = array<i64: 1, 1, 8, 1>}, {transform_indices = @transform_3, window_bounds = array<i64: 1, 1, 8, 1>}]} {
    %c0 = arith.constant 0 : index
    %c0_0 = arith.constant 0 : index
    %0 = vector.load %arg3[%c0, %c0_0] : memref<8x4xf32, #tpu.memory_space<vmem>>, vector<8x4xf32>
    %c0_1 = arith.constant 0 : index
    %c0_2 = arith.constant 0 : index
    %c0_3 = arith.constant 0 : index
    %1 = vector.load %arg2[%c0_1, %c0_2, %c0_3] : memref<1x4x16xf32, #tpu.memory_space<vmem>>, vector<1x4x16xf32>
    %2 = vector.shape_cast %1 : vector<1x4x16xf32> to vector<4x16xf32>
    %cst = arith.constant dense<0.000000e+00> : vector<8x16xf32>
    %3 = tpu.matmul %0, %2, %cst {dimension_numbers = #tpu.dot_dimension_numbers<[1], [0], [0], [1], [0, 0, 1, 1], [], []>} : vector<8x4xf32>, vector<4x16xf32>, vector<8x16xf32> -> vector<8x16xf32>
    %cst_4 = arith.constant dense<0.000000e+00> : vector<8xf32>
    %4 = vector.multi_reduction <add>, %3, %cst_4 [1] : vector<8x16xf32> to vector<8xf32>
    %5 = vector.shape_cast %4 : vector<8xf32> to vector<8x1xf32>
    %c0_5 = arith.constant 0 : index
    %c0_6 = arith.constant 0 : index
    %c0_7 = arith.constant 0 : index
    %c0_8 = arith.constant 0 : index
    %6 = vector.load %arg4[%c0_5, %c0_6, %c0_7, %c0_8] : memref<1x1x8x1xf32, #tpu.memory_space<vmem>>, vector<1x1x8x1xf32>
    %7 = vector.shape_cast %6 : vector<1x1x8x1xf32> to vector<8x1xf32>
    %8 = vector.shape_cast %5 : vector<8x1xf32> to vector<1x1x8x1xf32>
    tpu.vector_store %arg4[%c0_5, %c0_6, %c0_7, %c0_8], %8 {strides = array<i32>} : memref<1x1x8x1xf32, #tpu.memory_space<vmem>>, vector<1x1x8x1xf32>,
    %9 = arith.mulf %3, %3 : vector<8x16xf32>
    %cst_9 = arith.constant dense<0.000000e+00> : vector<8xf32>
    %10 = vector.multi_reduction <add>, %9, %cst_9 [1] : vector<8x16xf32> to vector<8xf32>
    %11 = vector.shape_cast %10 : vector<8xf32> to vector<8x1xf32>
    %c0_10 = arith.constant 0 : index
    %c0_11 = arith.constant 0 : index
    %c0_12 = arith.constant 0 : index
    %c0_13 = arith.constant 0 : index
    %12 = vector.load %arg5[%c0_10, %c0_11, %c0_12, %c0_13] : memref<1x1x8x1xf32, #tpu.memory_space<vmem>>, vector<1x1x8x1xf32>
    %13 = vector.shape_cast %12 : vector<1x1x8x1xf32> to vector<8x1xf32>
    %14 = vector.shape_cast %11 : vector<8x1xf32> to vector<1x1x8x1xf32>
    tpu.vector_store %arg5[%c0_10, %c0_11, %c0_12, %c0_13], %14 {strides = array<i32>} : memref<1x1x8x1xf32, #tpu.memory_space<vmem>>, vector<1x1x8x1xf32>,
    return
  }
  func.func @transform_0(%arg0: i32, %arg1: i32) -> (i32, i32, i32) {
    %c0_i32 = arith.constant 0 : i32
    %c0_i32_0 = arith.constant 0 : i32
    return %arg0, %c0_i32, %arg1 : i32, i32, i32
  }
  func.func @transform_1(%arg0: i32, %arg1: i32) -> (i32, i32) {
    %c0_i32 = arith.constant 0 : i32
    %c0_i32_0 = arith.constant 0 : i32
    %c0_i32_1 = arith.constant 0 : i32
    return %c0_i32, %c0_i32_0 : i32, i32
  }
  func.func @transform_2(%arg0: i32, %arg1: i32) -> (i32, i32, i32, i32) {
    %c0_i32 = arith.constant 0 : i32
    %c0_i32_0 = arith.constant 0 : i32
    %c0_i32_1 = arith.constant 0 : i32
    return %arg0, %arg1, %c0_i32, %c0_i32_0 : i32, i32, i32, i32
  }
  func.func @transform_3(%arg0: i32, %arg1: i32) -> (i32, i32, i32, i32) {
    %c0_i32 = arith.constant 0 : i32
    %c0_i32_0 = arith.constant 0 : i32
    %c0_i32_1 = arith.constant 0 : i32
    return %arg0, %arg1, %c0_i32, %c0_i32_0 : i32, i32, i32, i32
  }
}

module attributes {stable_mosaic.version = 11 : i64} {
  func.func @_apply_kernel(%arg0: i32, %arg1: i32, %arg2: memref<1x4x16xf32, #tpu.memory_space<vmem>>, %arg3: memref<8x4xf32, #tpu.memory_space<vmem>>, %arg4: memref<8x1xf32, #tpu.memory_space<vmem>>, %arg5: memref<8x1xf32, #tpu.memory_space<vmem>>, %arg6: memref<1x8x16xf32, #tpu.memory_space<vmem>>) attributes {dimension_semantics = [#tpu.dimension_semantics<parallel>, #tpu.dimension_semantics<parallel>], iteration_bounds = array<i64: 2, 1>, scalar_prefetch = 0 : i64, scratch_operands = 0 : i64, tpu.core_type = #tpu.core_type<tc>, window_params = [{transform_indices = @transform_0, window_bounds = array<i64: 1, 4, 16>}, {pipeline_mode = #tpu.pipeline_mode<synchronous>, transform_indices = @transform_1, window_bounds = array<i64: 8, 4>}, {pipeline_mode = #tpu.pipeline_mode<synchronous>, transform_indices = @transform_2, window_bounds = array<i64: 8, 1>}, {pipeline_mode = #tpu.pipeline_mode<synchronous>, transform_indices = @transform_3, window_bounds = array<i64: 8, 1>}, {transform_indices = @transform_4, window_bounds = array<i64: 1, 8, 16>}]} {
    %c0 = arith.constant 0 : index
    %c0_0 = arith.constant 0 : index
    %0 = vector.load %arg3[%c0, %c0_0] : memref<8x4xf32, #tpu.memory_space<vmem>>, vector<8x4xf32>
    %c0_1 = arith.constant 0 : index
    %c0_2 = arith.constant 0 : index
    %c0_3 = arith.constant 0 : index
    %1 = vector.load %arg2[%c0_1, %c0_2, %c0_3] : memref<1x4x16xf32, #tpu.memory_space<vmem>>, vector<1x4x16xf32>
    %2 = vector.shape_cast %1 : vector<1x4x16xf32> to vector<4x16xf32>
    %cst = arith.constant dense<0.000000e+00> : vector<8x16xf32>
    %3 = tpu.matmul %0, %2, %cst {dimension_numbers = #tpu.dot_dimension_numbers<[1], [0], [0], [1], [0, 0, 1, 1], [], []>} : vector<8x4xf32>, vector<4x16xf32>, vector<8x16xf32> -> vector<8x16xf32>
    %c0_4 = arith.constant 0 : index
    %c0_5 = arith.constant 0 : index
    %4 = vector.load %arg4[%c0_4, %c0_5] : memref<8x1xf32, #tpu.memory_space<vmem>>, vector<8x1xf32>
    %5 = vector.broadcast %4 : vector<8x1xf32> to vector<8x16xf32>
    %6 = arith.mulf %3, %5 : vector<8x16xf32>
    %c0_6 = arith.constant 0 : index
    %c0_7 = arith.constant 0 : index
    %7 = vector.load %arg5[%c0_6, %c0_7] : memref<8x1xf32, #tpu.memory_space<vmem>>, vector<8x1xf32>
    %8 = vector.broadcast %7 : vector<8x1xf32> to vector<8x16xf32>
    %9 = arith.addf %6, %8 : vector<8x16xf32>
    %cst_8 = arith.constant 5.000000e-01 : f32
    %10 = vector.broadcast %cst_8 : f32 to vector<8x16xf32>
    %11 = arith.mulf %10, %9 : vector<8x16xf32>
    %cst_9 = arith.constant 0.707106769 : f32
    %12 = vector.broadcast %cst_9 : f32 to vector<8x16xf32>
    %13 = arith.mulf %9, %12 : vector<8x16xf32>
    %14 = math.erf %13 : vector<8x16xf32>
    %cst_10 = arith.constant 1.000000e+00 : f32
    %15 = vector.broadcast %cst_10 : f32 to vector<8x16xf32>
    %16 = arith.addf %15, %14 : vector<8x16xf32>
    %17 = arith.mulf %11, %16 : vector<8x16xf32>
    %c0_11 = arith.constant 0 : index
    %c0_12 = arith.constant 0 : index
    %c0_13 = arith.constant 0 : index
    %18 = vector.load %arg6[%c0_11, %c0_12, %c0_13] : memref<1x8x16xf32, #tpu.memory_space<vmem>>, vector<1x8x16xf32>
    %19 = vector.shape_cast %18 : vector<1x8x16xf32> to vector<8x16xf32>
    %20 = vector.shape_cast %17 : vector<8x16xf32> to vector<1x8x16xf32>
    tpu.vector_store %arg6[%c0_11, %c0_12, %c0_13], %20 {strides = array<i32>} : memref<1x8x16xf32, #tpu.memory_space<vmem>>, vector<1x8x16xf32>,
    return
  }
  func.func @transform_0(%arg0: i32, %arg1: i32) -> (i32, i32, i32) {
    %c0_i32 = arith.constant 0 : i32
    %c0_i32_0 = arith.constant 0 : i32
    return %arg0, %c0_i32, %arg1 : i32, i32, i32
  }
  func.func @transform_1(%arg0: i32, %arg1: i32) -> (i32, i32) {
    %c0_i32 = arith.constant 0 : i32
    %c0_i32_0 = arith.constant 0 : i32
    %c0_i32_1 = arith.constant 0 : i32
    return %c0_i32, %c0_i32_0 : i32, i32
  }
  func.func @transform_2(%arg0: i32, %arg1: i32) -> (i32, i32) {
    %c0_i32 = arith.constant 0 : i32
    %c0_i32_0 = arith.constant 0 : i32
    %c0_i32_1 = arith.constant 0 : i32
    return %c0_i32, %c0_i32_0 : i32, i32
  }
  func.func @transform_3(%arg0: i32, %arg1: i32) -> (i32, i32) {
    %c0_i32 = arith.constant 0 : i32
    %c0_i32_0 = arith.constant 0 : i32
    %c0_i32_1 = arith.constant 0 : i32
    return %c0_i32, %c0_i32_0 : i32, i32
  }
  func.func @transform_4(%arg0: i32, %arg1: i32) -> (i32, i32, i32) {
    %c0_i32 = arith.constant 0 : i32
    %c0_i32_0 = arith.constant 0 : i32
    return %arg0, %c0_i32, %arg1 : i32, i32, i32
  }
}

</mosaic_0001>

<llo_original>
// kernel: fc_bn_gelu1d.2
$region0: #{fc_bn_gelu1d.2}
  #allocation0 [shape = 'u32[]', space=smem, size = 0x4, offset = 0x4, fixed_abs, tag = 'smem constant byte address 0x4 - core index']
  #allocation1 [shape = 'u32[144,128]{1,0:T(1,128)}', space=vmem, size = 0x12000, scoped, tag = 'internal scratch']
  %s0 = inlined_call_operand.vmem [shape: f32[2,4,16], index: 0, kind: input, shape index: {}]
  %s1 = inlined_call_operand.vmem [shape: f32[8,4], index: 1, kind: input, shape index: {}]
  %s2 = inlined_call_operand.vmem [shape: f32[2,1,8,1], index: 2, kind: output, shape index: {0}]
  %s3 = inlined_call_operand.vmem [shape: f32[2,1,8,1], index: 3, kind: output, shape index: {1}]
  %4 = xla_tuple %s2, %s3
  %s5 = sld [smem:[#allocation0]]
  $region49: #{fc_bn_gelu1d.2} parent=0
    _
  %s7 = ssub.s32 1, %s5
  %s8 = scalar_select 0, %s7, %s5
  loop: start=0, step=1, limit=4
  $region2: #{fc_bn_gelu1d.2} parent=0 // loop_pre_header
    _
  $region3: #{fc_bn_gelu1d.2} parent=0 // loop_header
    %s10 = sphi 0, %s14
    %p11 = scmp.ge.s32.totalorder %s10, 4
    %s17 = sphi 0, %s29
    %s18 = sphi 0, %s25
    %s19 = sphi 0, %s17
    %s20 = sphi 0, %s18
    %s21 = sphi 0, %s19
    %s22 = sphi 0, %s20
    %s34 = sphi 0, %s36
    %s37 = sphi 0, %s34
    %s38 = sphi 0, %s37
    %s54 = sphi 0, %s38
    %s58 = sphi 0, %s58
    %s60 = sphi 0, %s58
    %s61 = sphi 0, %s60
    %s75 = sphi 0, %s61
    %s83 = sphi 0, %s85
    %s86 = sphi 0, %s83
    %s87 = sphi 0, %s86
    %s103 = sphi 0, %s87
    %s111 = sphi 0, %s113
    %s114 = sphi 0, %s111
    %s115 = sphi 0, %s114
    %s131 = sphi 0, %s115
  $region4: #{fc_bn_gelu1d.2} parent=0 // loop_header_branch
    %13 = sbr.rel (%p11) target = $region8
  $region5: #{fc_bn_gelu1d.2} parent=0 // loop_body
    %s15 = ssub.s32 %s10, 1
    %s16 = ssub.s32 %s10, 2
    %s23 = sadd.s32 1, %s18
    %p24 = scmp.ge.s32.totalorder %s23, 1
    %s25 = scalar_select %p24, 0, %s23
    %s26 = sadd.s32 1, %s17
    %s27 = scalar_select %p24, %s26, %s17
    %p28 = scmp.ge.s32.totalorder %s27, 2
    %s29 = scalar_select %p28, 0, %s27
    %s30 = ssub.s32 %s17, %s29
    %s31 = ssub.s32 %s18, %s25
    %s32 = sor.u32 %s30, %s31
    %p33 = scmp.eq.s32.totalorder %s32, 0
    %s35 = sadd.s32 %s34, 1
    %s36 = scalar_select %p33, %s34, %s35
    %p39 = pneg %p33
    %p40 = scmp.eq.s32.totalorder %s10, 1
    %p41 = por %p39, %p40
    %p42 = scmp.ne.s32.totalorder %s34, %s37
    %p43 = scmp.eq.s32.totalorder %s10, 0
    %p44 = por %p42, %p43
    %p45 = scmp.ne.s32.totalorder %s34, %s37
    %p46 = scmp.eq.s32.totalorder %s15, 1
    %p47 = por %p45, %p46
    %p48 = scmp.ne.s32.totalorder %s37, %s38
    %p49 = scmp.eq.s32.totalorder %s15, 0
    %p50 = por %p48, %p49
    %p51 = scmp.ne.s32.totalorder %s37, %s38
    %p52 = scmp.eq.s32.totalorder %s16, 1
    %p53 = por %p51, %p52
    %p55 = scmp.ne.s32.totalorder %s38, %s54
    %p56 = scmp.eq.s32.totalorder %s16, 0
    %p57 = por %p55, %p56
    %s59 = sadd.s32 %s58, 1
    %p62 = scmp.eq.s32.totalorder %s10, 1
    %p63 = scmp.ne.s32.totalorder %s58, %s60
    %p64 = scmp.eq.s32.totalorder %s10, 0
    %p65 = por %p63, %p64
    %p66 = scmp.ne.s32.totalorder %s58, %s60
    %p67 = scmp.eq.s32.totalorder %s15, 1
    %p68 = por %p66, %p67
    %p69 = scmp.ne.s32.totalorder %s60, %s61
    %p70 = scmp.eq.s32.totalorder %s15, 0
    %p71 = por %p69, %p70
    %p72 = scmp.ne.s32.totalorder %s60, %s61
    %p73 = scmp.eq.s32.totalorder %s16, 1
    %p74 = por %p72, %p73
    %p76 = scmp.ne.s32.totalorder %s61, %s75
    %p77 = scmp.eq.s32.totalorder %s16, 0
    %p78 = por %p76, %p77
    %s79 = ssub.s32 %s17, %s29
    %s80 = ssub.s32 %s18, %s25
    %s81 = sor.u32 %s79, %s80
    %p82 = scmp.eq.s32.totalorder %s81, 0
    %s84 = sadd.s32 %s83, 1
    %s85 = scalar_select %p82, %s83, %s84
    %p88 = pneg %p82
    %p89 = scmp.eq.s32.totalorder %s10, 1
    %p90 = por %p88, %p89
    %p91 = scmp.ne.s32.totalorder %s83, %s86
    %p92 = scmp.eq.s32.totalorder %s10, 0
    %p93 = por %p91, %p92
    %p94 = scmp.ne.s32.totalorder %s83, %s86
    %p95 = scmp.eq.s32.totalorder %s15, 1
    %p96 = por %p94, %p95
    %p97 = scmp.ne.s32.totalorder %s86, %s87
    %p98 = scmp.eq.s32.totalorder %s15, 0
    %p99 = por %p97, %p98
    %p100 = scmp.ne.s32.totalorder %s86, %s87
    %p101 = scmp.eq.s32.totalorder %s16, 1
    %p102 = por %p100, %p101
    %p104 = scmp.ne.s32.totalorder %s87, %s103
    %p105 = scmp.eq.s32.totalorder %s16, 0
    %p106 = por %p104, %p105
    %s107 = ssub.s32 %s17, %s29
    %s108 = ssub.s32 %s18, %s25
    %s109 = sor.u32 %s107, %s108
    %p110 = scmp.eq.s32.totalorder %s109, 0
    %s112 = sadd.s32 %s111, 1
    %s113 = scalar_select %p110, %s111, %s112
    %p116 = pneg %p110
    %p117 = scmp.eq.s32.totalorder %s10, 1
    %p118 = por %p116, %p117
    %p119 = scmp.ne.s32.totalorder %s111, %s114
    %p120 = scmp.eq.s32.totalorder %s10, 0
    %p121 = por %p119, %p120
    %p122 = scmp.ne.s32.totalorder %s111, %s114
    %p123 = scmp.eq.s32.totalorder %s15, 1
    %p124 = por %p122, %p123
    %p125 = scmp.ne.s32.totalorder %s114, %s115
    %p126 = scmp.eq.s32.totalorder %s15, 0
    %p127 = por %p125, %p126
    %p128 = scmp.ne.s32.totalorder %s114, %s115
    %p129 = scmp.eq.s32.totalorder %s16, 1
    %p130 = por %p128, %p129
    %p132 = scmp.ne.s32.totalorder %s115, %s131
    %p133 = scmp.eq.s32.totalorder %s16, 0
    %p134 = por %p132, %p133
    %p135 = scmp.le.s32.totalorder 1, %s10
    %p136 = scmp.lt.s32.totalorder %s10, 3
    %p137 = pnand %p135, %p136
    %p138 = pneg %p137
    // Predicated region
    $region9: #{fc_bn_gelu1d.2} parent=5 // pred_check
      _
    $region10: #{fc_bn_gelu1d.2} parent=5 // pred_check_branch
      %140 = sbr.rel (%p137) target = $region12
    $region11: #{fc_bn_gelu1d.2} parent=5 // pred_region
      %s141 = ssub.s32 %s10, 1
      // Predicated region
      $region13: #{fc_bn_gelu1d.2} parent=11 // pred_check
        %p142 = pneg %p71
      $region14: #{fc_bn_gelu1d.2} parent=11 // pred_check_branch
        %144 = sbr.rel (%p142) target = $region16
      $region15: #{fc_bn_gelu1d.2} parent=11 // pred_region
        _
      $region16: #{fc_bn_gelu1d.2} parent=11 // pred_fallthru
        _
    $region12: #{fc_bn_gelu1d.2} parent=5 // pred_fallthru
      _
    %p145 = scmp.lt.s32.totalorder %s10, 2
    // Predicated region
    $region17: #{fc_bn_gelu1d.2} parent=5 // pred_check
      %p146 = pneg %p145
    $region18: #{fc_bn_gelu1d.2} parent=5 // pred_check_branch
      %148 = sbr.rel (%p146) target = $region20
    $region19: #{fc_bn_gelu1d.2} parent=5 // pred_region
      // Predicated region
      $region21: #{fc_bn_gelu1d.2} parent=19 // pred_check
        %p149 = pneg %p44
      $region22: #{fc_bn_gelu1d.2} parent=19 // pred_check_branch
        %151 = sbr.rel (%p149) target = $region24
      $region23: #{fc_bn_gelu1d.2} parent=19 // pred_region
        %p152 = scmp.lt.s32.totalorder %s17, 1
        %s153 = scalar_select %p152, %s17, 1
        %p154 = scmp.lt.s32.totalorder %s18, 0
        %s155 = scalar_select %p154, %s18, 0
        %s156 = sadd.s32 %s155, %s153
        %s157 = smul.addr %s156, 4
        %s158 = scalar_lea.vmem %s0, %s157
      $region24: #{fc_bn_gelu1d.2} parent=19 // pred_fallthru
        _
    $region20: #{fc_bn_gelu1d.2} parent=5 // pred_fallthru
      _
    %p159 = scmp.le.s32.totalorder 1, %s10
    %p160 = scmp.lt.s32.totalorder %s10, 3
    %p161 = pnand %p159, %p160
    %p162 = pneg %p161
    // Predicated region
    $region25: #{fc_bn_gelu1d.2} parent=5 // pred_check
      _
    $region26: #{fc_bn_gelu1d.2} parent=5 // pred_check_branch
      %164 = sbr.rel (%p161) target = $region28
    $region27: #{fc_bn_gelu1d.2} parent=5 // pred_region
      %s165 = ssub.s32 %s10, 1
      %p166 = scmp.lt.s32.totalorder %s19, 1
      %s167 = scalar_select %p166, %s19, 1
      %p168 = scmp.lt.s32.totalorder %s20, 0
      %s169 = scalar_select %p168, %s20, 0
      %s170 = sadd.s32 %s169, %s167
      %s171 = smul.addr %s170, 4
      %s172 = scalar_lea.vmem %s0, %s171
      %p173 = pneg %p50
      %p174 = pneg %p47
      %p175 = pneg %p71
      %p176 = pneg %p68
      %p177 = pneg %p99
      %p178 = pneg %p96
      %p179 = scmp.lt.s32.totalorder %s19, 1
      %s180 = scalar_select %p179, %s19, 1
      %p181 = scmp.lt.s32.totalorder %s20, 0
      %s182 = scalar_select %p181, %s20, 0
      %s183 = sadd.s32 %s182, %s180
      %s184 = smul.addr %s183, 8
      %s185 = scalar_lea.vmem %s2, %s184
      %p186 = pneg %p127
      %p187 = pneg %p124
      %p188 = scmp.lt.s32.totalorder %s19, 1
      %s189 = scalar_select %p188, %s19, 1
      %p190 = scmp.lt.s32.totalorder %s20, 0
      %s191 = scalar_select %p190, %s20, 0
      %s192 = sadd.s32 %s191, %s189
      %s193 = smul.addr %s192, 8
      %s194 = scalar_lea.vmem %s3, %s193
      %p195 = scmp.lt.s32.totalorder %s19, 1
      %s196 = scalar_select %p195, %s19, 1
      %p197 = scmp.lt.s32.totalorder %s20, 0
      %s198 = scalar_select %p197, %s20, 0
      %s199 = sadd.s32 %s198, %s196
      %s200 = smul.addr %s199, 4
      %s201 = scalar_lea.vmem %s0, %s200
      %p202 = scmp.lt.s32.totalorder %s19, 1
      %s203 = scalar_select %p202, %s19, 1
      %p204 = scmp.lt.s32.totalorder %s20, 0
      %s205 = scalar_select %p204, %s20, 0
      %s206 = sadd.s32 %s205, %s203
      %s207 = smul.addr %s206, 8
      %s208 = scalar_lea.vmem %s2, %s207
      %p209 = scmp.lt.s32.totalorder %s19, 1
      %s210 = scalar_select %p209, %s19, 1
      %p211 = scmp.lt.s32.totalorder %s20, 0
      %s212 = scalar_select %p211, %s20, 0
      %s213 = sadd.s32 %s212, %s210
      %s214 = smul.addr %s213, 8
      %s215 = scalar_lea.vmem %s3, %s214
      %v216 = vld [vmem:[%s1] sm:$0xff]
      %v217 = vld [vmem:[%s201] sm:$0xf]
      %vm218 = vcmask 31744
      %v220 = vsel %vm218, %v216, 0
      %vm222 = vcmask 1043456
      %v224 = vsel %vm222, %v217, 0
      %226 = vmatprep.subr.mxu0 0.0
      %227 = vmatpush1.msra.mxu0 0.0
      %228 = vmatprep.subr.mxu0 0.0
      %229 = vmatpush1.msra.mxu0 0.0
      %230 = vmatprep.subr.mxu0 0.0
      %231 = vmatpush1.msra.mxu0 0.0
      %232 = vmatprep.subr.mxu0 0.0
      %233 = vmatpush1.msra.mxu0 0.0
      %234 = vmatprep.subr.mxu0 0.0
      %235 = vmatpush1.msra.mxu0 0.0
      %236 = vmatprep.subr.mxu0 0.0
      %237 = vmatpush1.msra.mxu0 0.0
      %238 = vmatprep.subr.mxu0 0.0
      %239 = vmatpush1.msra.mxu0 0.0
      %240 = vmatprep.subr.mxu0 0.0
      %241 = vmatpush1.msra.mxu0 0.0
      %242 = vmatprep.subr.mxu0 0.0
      %243 = vmatpush1.msra.mxu0 0.0
      %244 = vmatprep.subr.mxu0 0.0
      %245 = vmatpush1.msra.mxu0 0.0
      %246 = vmatprep.subr.mxu0 0.0
      %247 = vmatpush1.msra.mxu0 0.0
      %248 = vmatprep.subr.mxu0 0.0
      %249 = vmatpush1.msra.mxu0 0.0
      %250 = vmatprep.subr.mxu0 0.0
      %251 = vmatpush1.msra.mxu0 0.0
      %252 = vmatprep.subr.mxu0 0.0
      %253 = vmatpush1.msra.mxu0 0.0
      %254 = vmatprep.subr.mxu0 0.0
      %255 = vmatpush1.msra.mxu0 0.0
      %256 = vmatprep.subr.mxu0 0.0
      %257 = vmatpush1.msra.mxu0 %v224
      %258 = vmatprep.subr.mxu0 0.0
      %259 = vmatpush2.msra.mxu0 0.0
      %260 = vmatprep.subr.mxu0 0.0
      %261 = vmatpush2.msra.mxu0 0.0
      %262 = vmatprep.subr.mxu0 0.0
      %263 = vmatpush2.msra.mxu0 0.0
      %264 = vmatprep.subr.mxu0 0.0
      %265 = vmatpush2.msra.mxu0 0.0
      %266 = vmatprep.subr.mxu0 0.0
      %267 = vmatpush2.msra.mxu0 0.0
      %268 = vmatprep.subr.mxu0 0.0
      %269 = vmatpush2.msra.mxu0 0.0
      %270 = vmatprep.subr.mxu0 0.0
      %271 = vmatpush2.msra.mxu0 0.0
      %272 = vmatprep.subr.mxu0 0.0
      %273 = vmatpush2.msra.mxu0 0.0
      %274 = vmatprep.subr.mxu0 0.0
      %275 = vmatpush2.msra.mxu0 0.0
      %276 = vmatprep.subr.mxu0 0.0
      %277 = vmatpush2.msra.mxu0 0.0
      %278 = vmatprep.subr.mxu0 0.0
      %279 = vmatpush2.msra.mxu0 0.0
      %280 = vmatprep.subr.mxu0 0.0
      %281 = vmatpush2.msra.mxu0 0.0
      %282 = vmatprep.subr.mxu0 0.0
      %283 = vmatpush2.msra.mxu0 0.0
      %284 = vmatprep.subr.mxu0 0.0
      %285 = vmatpush2.msra.mxu0 0.0
      %286 = vmatprep.subr.mxu0 0.0
      %287 = vmatpush2.msra.mxu0 0.0
      %288 = vmatprep.subr.mxu0 0.0
      %289 = vmatpush2.msra.mxu0 0.0
      %290 = vmatprep.mubr.f32.mxu0 0.0
      %291 = vmatmul.mubr.f32.gmra.mxu0 %v220
      %v292 = vpop.f32.mrf.mxu0
      %v293 = vadd.f32 0.0, %v292
      %v294 = vpop.f32.mrf.mxu0
      %295 = vdwg.mxu0
      %vm296 = vcmask 130048
      %v297 = vsel %vm296, %v293, 0.0
      %298 = vadd.xlane.f32.xlu0 %v297
      %v299 = vpop.xlane.xlu0 %298
      %vm300 = vcmask 7168
      %301 = vst.msk [vmem:[%s208] sm:$0xff] %vm300, %v299
      %v302 = vmul.f32 %v293, %v293
      %v303 = vsel %vm296, %v302, 0.0
      %304 = vadd.xlane.f32.xlu0 %v303
      %v305 = vpop.xlane.xlu0 %304
      %306 = vst.msk [vmem:[%s215] sm:$0xff] %vm300, %v305
      %p307 = scmp.lt.s32.totalorder %s19, 1
      %s308 = scalar_select %p307, %s19, 1
      %p309 = scmp.lt.s32.totalorder %s20, 0
      %s310 = scalar_select %p309, %s20, 0
      %s311 = sadd.s32 %s310, %s308
      %s312 = smul.addr %s311, 8
      %s313 = scalar_lea.vmem %s2, %s312
      %p314 = scmp.lt.s32.totalorder %s19, 1
      %s315 = scalar_select %p314, %s19, 1
      %p316 = scmp.lt.s32.totalorder %s20, 0
      %s317 = scalar_select %p316, %s20, 0
      %s318 = sadd.s32 %s317, %s315
      %s319 = smul.addr %s318, 8
      %s320 = scalar_lea.vmem %s3, %s319
      // Predicated region
      $region29: #{fc_bn_gelu1d.2} parent=27 // pred_check
        %p321 = pneg %p96
      $region30: #{fc_bn_gelu1d.2} parent=27 // pred_check_branch
        %323 = sbr.rel (%p321) target = $region32
      $region31: #{fc_bn_gelu1d.2} parent=27 // pred_region
        _
      $region32: #{fc_bn_gelu1d.2} parent=27 // pred_fallthru
        _
      // Predicated region
      $region33: #{fc_bn_gelu1d.2} parent=27 // pred_check
        %p324 = pneg %p124
      $region34: #{fc_bn_gelu1d.2} parent=27 // pred_check_branch
        %326 = sbr.rel (%p324) target = $region36
      $region35: #{fc_bn_gelu1d.2} parent=27 // pred_region
        _
      $region36: #{fc_bn_gelu1d.2} parent=27 // pred_fallthru
        _
    $region28: #{fc_bn_gelu1d.2} parent=5 // pred_fallthru
      _
    %p327 = scmp.le.s32.totalorder 2, %s10
    // Predicated region
    $region37: #{fc_bn_gelu1d.2} parent=5 // pred_check
      %p328 = pneg %p327
    $region38: #{fc_bn_gelu1d.2} parent=5 // pred_check_branch
      %330 = sbr.rel (%p328) target = $region40
    $region39: #{fc_bn_gelu1d.2} parent=5 // pred_region
      %s331 = ssub.s32 %s10, 2
      // Predicated region
      $region41: #{fc_bn_gelu1d.2} parent=39 // pred_check
        %p332 = pneg %p102
      $region42: #{fc_bn_gelu1d.2} parent=39 // pred_check_branch
        %334 = sbr.rel (%p332) target = $region44
      $region43: #{fc_bn_gelu1d.2} parent=39 // pred_region
        %p335 = scmp.lt.s32.totalorder %s21, 1
        %s336 = scalar_select %p335, %s21, 1
        %p337 = scmp.lt.s32.totalorder %s22, 0
        %s338 = scalar_select %p337, %s22, 0
        %s339 = sadd.s32 %s338, %s336
        %s340 = smul.addr %s339, 8
        %s341 = scalar_lea.vmem %s2, %s340
      $region44: #{fc_bn_gelu1d.2} parent=39 // pred_fallthru
        _
      // Predicated region
      $region45: #{fc_bn_gelu1d.2} parent=39 // pred_check
        %p342 = pneg %p130
      $region46: #{fc_bn_gelu1d.2} parent=39 // pred_check_branch
        %344 = sbr.rel (%p342) target = $region48
      $region47: #{fc_bn_gelu1d.2} parent=39 // pred_region
        %p345 = scmp.lt.s32.totalorder %s21, 1
        %s346 = scalar_select %p345, %s21, 1
        %p347 = scmp.lt.s32.totalorder %s22, 0
        %s348 = scalar_select %p347, %s22, 0
        %s349 = sadd.s32 %s348, %s346
        %s350 = smul.addr %s349, 8
        %s351 = scalar_lea.vmem %s3, %s350
      $region48: #{fc_bn_gelu1d.2} parent=39 // pred_fallthru
        _
    $region40: #{fc_bn_gelu1d.2} parent=5 // pred_fallthru
      _
  $region6: #{fc_bn_gelu1d.2} parent=0 // loop_footer
    %s14 = sadd.s32 1, %s10
  $region7: #{fc_bn_gelu1d.2} parent=0 // loop_footer_branch
    %9 = sbr.rel target = $region3
  $region8: #{fc_bn_gelu1d.2} parent=0 // loop_exit
    _

// kernel: fc_bn_gelu1d.3
$region0: #{fc_bn_gelu1d.3}
  #allocation0 [shape = 'u32[]', space=smem, size = 0x4, offset = 0x4, fixed_abs, tag = 'smem constant byte address 0x4 - core index']
  #allocation1 [shape = 'u32[144,128]{1,0:T(1,128)}', space=vmem, size = 0x12000, scoped, tag = 'internal scratch']
  %s0 = inlined_call_operand.vmem [shape: f32[2,4,16], index: 0, kind: input, shape index: {}]
  %s1 = inlined_call_operand.vmem [shape: f32[8,4], index: 1, kind: input, shape index: {}]
  %s2 = inlined_call_operand.vmem [shape: f32[8,1], index: 2, kind: input, shape index: {}]
  %s3 = inlined_call_operand.vmem [shape: f32[8,1], index: 3, kind: input, shape index: {}]
  %s4 = inlined_call_operand.hbm [shape: f32[2,8,16], index: 4, kind: output, shape index: {}]
  %s5 = sld [smem:[#allocation0]]
  $region49: #{fc_bn_gelu1d.3} parent=0
    _
  %s7 = ssub.s32 1, %s5
  %s8 = scalar_select 0, %s7, %s5
  $region1: #{fc_bn_gelu1d.3} parent=0
    #allocation2 [shape = 'u8[8192]{0}', space=vmem, size = 0x2000, scoped, tag = 'output window, operand 0']
    #allocation3 [shape = 's32[2]{0}', space=sflag, size = 0x8, scoped, tag = 'scoped memory for fc_bn_gelu1d.3']
    %9 = vsyncpa [#allocation3], 0
    %s10 = scalar_lea.sflag [#allocation3], 1
    %11 = vsyncpa %s10, 0
    loop: start=0, step=1, limit=4
    $region2: #{fc_bn_gelu1d.3} parent=1 // loop_pre_header
      _
    $region3: #{fc_bn_gelu1d.3} parent=1 // loop_header
      %s13 = sphi 0, %s17
      %p14 = scmp.ge.s32.totalorder %s13, 4
      %s20 = sphi 0, %s32
      %s21 = sphi 0, %s28
      %s22 = sphi 0, %s20
      %s23 = sphi 0, %s21
      %s24 = sphi 0, %s22
      %s25 = sphi 0, %s23
      %s37 = sphi 0, %s39
      %s40 = sphi 0, %s37
      %s41 = sphi 0, %s40
      %s57 = sphi 0, %s41
      %s61 = sphi 0, %s61
      %s63 = sphi 0, %s61
      %s64 = sphi 0, %s63
      %s78 = sphi 0, %s64
      %s82 = sphi 0, %s82
      %s84 = sphi 0, %s82
      %s85 = sphi 0, %s84
      %s99 = sphi 0, %s85
      %s103 = sphi 0, %s103
      %s105 = sphi 0, %s103
      %s106 = sphi 0, %s105
      %s120 = sphi 0, %s106
      %s128 = sphi 0, %s130
      %s131 = sphi 0, %s128
      %s132 = sphi 0, %s131
      %s148 = sphi 0, %s132
    $region4: #{fc_bn_gelu1d.3} parent=1 // loop_header_branch
      %16 = sbr.rel (%p14) target = $region8
    $region5: #{fc_bn_gelu1d.3} parent=1 // loop_body
      %s18 = ssub.s32 %s13, 1
      %s19 = ssub.s32 %s13, 2
      %s26 = sadd.s32 1, %s21
      %p27 = scmp.ge.s32.totalorder %s26, 1
      %s28 = scalar_select %p27, 0, %s26
      %s29 = sadd.s32 1, %s20
      %s30 = scalar_select %p27, %s29, %s20
      %p31 = scmp.ge.s32.totalorder %s30, 2
      %s32 = scalar_select %p31, 0, %s30
      %s33 = ssub.s32 %s20, %s32
      %s34 = ssub.s32 %s21, %s28
      %s35 = sor.u32 %s33, %s34
      %p36 = scmp.eq.s32.totalorder %s35, 0
      %s38 = sadd.s32 %s37, 1
      %s39 = scalar_select %p36, %s37, %s38
      %p42 = pneg %p36
      %p43 = scmp.eq.s32.totalorder %s13, 1
      %p44 = por %p42, %p43
      %p45 = scmp.ne.s32.totalorder %s37, %s40
      %p46 = scmp.eq.s32.totalorder %s13, 0
      %p47 = por %p45, %p46
      %p48 = scmp.ne.s32.totalorder %s37, %s40
      %p49 = scmp.eq.s32.totalorder %s18, 1
      %p50 = por %p48, %p49
      %p51 = scmp.ne.s32.totalorder %s40, %s41
      %p52 = scmp.eq.s32.totalorder %s18, 0
      %p53 = por %p51, %p52
      %p54 = scmp.ne.s32.totalorder %s40, %s41
      %p55 = scmp.eq.s32.totalorder %s19, 1
      %p56 = por %p54, %p55
      %p58 = scmp.ne.s32.totalorder %s41, %s57
      %p59 = scmp.eq.s32.totalorder %s19, 0
      %p60 = por %p58, %p59
      %s62 = sadd.s32 %s61, 1
      %p65 = scmp.eq.s32.totalorder %s13, 1
      %p66 = scmp.ne.s32.totalorder %s61, %s63
      %p67 = scmp.eq.s32.totalorder %s13, 0
      %p68 = por %p66, %p67
      %p69 = scmp.ne.s32.totalorder %s61, %s63
      %p70 = scmp.eq.s32.totalorder %s18, 1
      %p71 = por %p69, %p70
      %p72 = scmp.ne.s32.totalorder %s63, %s64
      %p73 = scmp.eq.s32.totalorder %s18, 0
      %p74 = por %p72, %p73
      %p75 = scmp.ne.s32.totalorder %s63, %s64
      %p76 = scmp.eq.s32.totalorder %s19, 1
      %p77 = por %p75, %p76
      %p79 = scmp.ne.s32.totalorder %s64, %s78
      %p80 = scmp.eq.s32.totalorder %s19, 0
      %p81 = por %p79, %p80
      %s83 = sadd.s32 %s82, 1
      %p86 = scmp.eq.s32.totalorder %s13, 1
      %p87 = scmp.ne.s32.totalorder %s82, %s84
      %p88 = scmp.eq.s32.totalorder %s13, 0
      %p89 = por %p87, %p88
      %p90 = scmp.ne.s32.totalorder %s82, %s84
      %p91 = scmp.eq.s32.totalorder %s18, 1
      %p92 = por %p90, %p91
      %p93 = scmp.ne.s32.totalorder %s84, %s85
      %p94 = scmp.eq.s32.totalorder %s18, 0
      %p95 = por %p93, %p94
      %p96 = scmp.ne.s32.totalorder %s84, %s85
      %p97 = scmp.eq.s32.totalorder %s19, 1
      %p98 = por %p96, %p97
      %p100 = scmp.ne.s32.totalorder %s85, %s99
      %p101 = scmp.eq.s32.totalorder %s19, 0
      %p102 = por %p100, %p101
      %s104 = sadd.s32 %s103, 1
      %p107 = scmp.eq.s32.totalorder %s13, 1
      %p108 = scmp.ne.s32.totalorder %s103, %s105
      %p109 = scmp.eq.s32.totalorder %s13, 0
      %p110 = por %p108, %p109
      %p111 = scmp.ne.s32.totalorder %s103, %s105
      %p112 = scmp.eq.s32.totalorder %s18, 1
      %p113 = por %p111, %p112
      %p114 = scmp.ne.s32.totalorder %s105, %s106
      %p115 = scmp.eq.s32.totalorder %s18, 0
      %p116 = por %p114, %p115
      %p117 = scmp.ne.s32.totalorder %s105, %s106
      %p118 = scmp.eq.s32.totalorder %s19, 1
      %p119 = por %p117, %p118
      %p121 = scmp.ne.s32.totalorder %s106, %s120
      %p122 = scmp.eq.s32.totalorder %s19, 0
      %p123 = por %p121, %p122
      %s124 = ssub.s32 %s20, %s32
      %s125 = ssub.s32 %s21, %s28
      %s126 = sor.u32 %s124, %s125
      %p127 = scmp.eq.s32.totalorder %s126, 0
      %s129 = sadd.s32 %s128, 1
      %s130 = scalar_select %p127, %s128, %s129
      %p133 = pneg %p127
      %p134 = scmp.eq.s32.totalorder %s13, 1
      %p135 = por %p133, %p134
      %p136 = scmp.ne.s32.totalorder %s128, %s131
      %p137 = scmp.eq.s32.totalorder %s13, 0
      %p138 = por %p136, %p137
      %p139 = scmp.ne.s32.totalorder %s128, %s131
      %p140 = scmp.eq.s32.totalorder %s18, 1
      %p141 = por %p139, %p140
      %p142 = scmp.ne.s32.totalorder %s131, %s132
      %p143 = scmp.eq.s32.totalorder %s18, 0
      %p144 = por %p142, %p143
      %p145 = scmp.ne.s32.totalorder %s131, %s132
      %p146 = scmp.eq.s32.totalorder %s19, 1
      %p147 = por %p145, %p146
      %p149 = scmp.ne.s32.totalorder %s132, %s148
      %p150 = scmp.eq.s32.totalorder %s19, 0
      %p151 = por %p149, %p150
      %p152 = scmp.le.s32.totalorder 1, %s13
      %p153 = scmp.lt.s32.totalorder %s13, 3
      %p154 = pnand %p152, %p153
      %p155 = pneg %p154
      // Predicated region
      $region9: #{fc_bn_gelu1d.3} parent=5 // pred_check
        _
      $region10: #{fc_bn_gelu1d.3} parent=5 // pred_check_branch
        %157 = sbr.rel (%p154) target = $region12
      $region11: #{fc_bn_gelu1d.3} parent=5 // pred_region
        %s158 = ssub.s32 %s13, 1
        // Predicated region
        $region13: #{fc_bn_gelu1d.3} parent=11 // pred_check
          %p159 = pneg %p74
        $region14: #{fc_bn_gelu1d.3} parent=11 // pred_check_branch
          %161 = sbr.rel (%p159) target = $region16
        $region15: #{fc_bn_gelu1d.3} parent=11 // pred_region
          _
        $region16: #{fc_bn_gelu1d.3} parent=11 // pred_fallthru
          _
        // Predicated region
        $region17: #{fc_bn_gelu1d.3} parent=11 // pred_check
          %p162 = pneg %p95
        $region18: #{fc_bn_gelu1d.3} parent=11 // pred_check_branch
          %164 = sbr.rel (%p162) target = $region20
        $region19: #{fc_bn_gelu1d.3} parent=11 // pred_region
          _
        $region20: #{fc_bn_gelu1d.3} parent=11 // pred_fallthru
          _
        // Predicated region
        $region21: #{fc_bn_gelu1d.3} parent=11 // pred_check
          %p165 = pneg %p116
        $region22: #{fc_bn_gelu1d.3} parent=11 // pred_check_branch
          %167 = sbr.rel (%p165) target = $region24
        $region23: #{fc_bn_gelu1d.3} parent=11 // pred_region
          _
        $region24: #{fc_bn_gelu1d.3} parent=11 // pred_fallthru
          _
      $region12: #{fc_bn_gelu1d.3} parent=5 // pred_fallthru
        _
      %p168 = scmp.lt.s32.totalorder %s13, 2
      // Predicated region
      $region25: #{fc_bn_gelu1d.3} parent=5 // pred_check
        %p169 = pneg %p168
      $region26: #{fc_bn_gelu1d.3} parent=5 // pred_check_branch
        %171 = sbr.rel (%p169) target = $region28
      $region27: #{fc_bn_gelu1d.3} parent=5 // pred_region
        // Predicated region
        $region29: #{fc_bn_gelu1d.3} parent=27 // pred_check
          %p172 = pneg %p47
        $region30: #{fc_bn_gelu1d.3} parent=27 // pred_check_branch
          %174 = sbr.rel (%p172) target = $region32
        $region31: #{fc_bn_gelu1d.3} parent=27 // pred_region
          %p175 = scmp.lt.s32.totalorder %s20, 1
          %s176 = scalar_select %p175, %s20, 1
          %p177 = scmp.lt.s32.totalorder %s21, 0
          %s178 = scalar_select %p177, %s21, 0
          %s179 = sadd.s32 %s178, %s176
          %s180 = smul.addr %s179, 4
          %s181 = scalar_lea.vmem %s0, %s180
        $region32: #{fc_bn_gelu1d.3} parent=27 // pred_fallthru
          _
      $region28: #{fc_bn_gelu1d.3} parent=5 // pred_fallthru
        _
      %p182 = scmp.le.s32.totalorder 1, %s13
      %p183 = scmp.lt.s32.totalorder %s13, 3
      %p184 = pnand %p182, %p183
      %p185 = pneg %p184
      // Predicated region
      $region33: #{fc_bn_gelu1d.3} parent=5 // pred_check
        _
      $region34: #{fc_bn_gelu1d.3} parent=5 // pred_check_branch
        %187 = sbr.rel (%p184) target = $region36
      $region35: #{fc_bn_gelu1d.3} parent=5 // pred_region
        %s188 = ssub.s32 %s13, 1
        %p189 = scmp.lt.s32.totalorder %s22, 1
        %s190 = scalar_select %p189, %s22, 1
        %p191 = scmp.lt.s32.totalorder %s23, 0
        %s192 = scalar_select %p191, %s23, 0
        %s193 = sadd.s32 %s192, %s190
        %s194 = smul.addr %s193, 4
        %s195 = scalar_lea.vmem %s0, %s194
        %p196 = pneg %p53
        %p197 = pneg %p50
        %p198 = pneg %p74
        %p199 = pneg %p71
        %p200 = pneg %p95
        %p201 = pneg %p92
        %p202 = pneg %p116
        %p203 = pneg %p113
        %p204 = pneg %p144
        %p205 = pneg %p141
        %s206 = sand.u32 %s131, 1
        %s207 = scalar_lea.sflag [#allocation3], %s206
        %s208 = sand.u32 %s131, 1
        %s209 = smul.addr %s208, 8
        %s210 = scalar_lea.vmem [#allocation2], %s209
        %p211 = scmp.lt.s32.totalorder %s22, 1
        %s212 = scalar_select %p211, %s22, 1
        %p213 = scmp.lt.s32.totalorder %s23, 0
        %s214 = scalar_select %p213, %s23, 0
        %s215 = sadd.s32 %s214, %s212
        %s216 = smul.addr %s215, 4
        %s217 = scalar_lea.vmem %s0, %s216
        %v218 = vld [vmem:[%s1] sm:$0xff]
        %v219 = vld [vmem:[%s217] sm:$0xf]
        %vm220 = vcmask 31744
        %v222 = vsel %vm220, %v218, 0
        %vm224 = vcmask 1043456
        %v226 = vsel %vm224, %v219, 0
        %228 = vmatprep.subr.mxu0 0.0
        %229 = vmatpush1.msra.mxu0 0.0
        %230 = vmatprep.subr.mxu0 0.0
        %231 = vmatpush1.msra.mxu0 0.0
        %232 = vmatprep.subr.mxu0 0.0
        %233 = vmatpush1.msra.mxu0 0.0
        %234 = vmatprep.subr.mxu0 0.0
        %235 = vmatpush1.msra.mxu0 0.0
        %236 = vmatprep.subr.mxu0 0.0
        %237 = vmatpush1.msra.mxu0 0.0
        %238 = vmatprep.subr.mxu0 0.0
        %239 = vmatpush1.msra.mxu0 0.0
        %240 = vmatprep.subr.mxu0 0.0
        %241 = vmatpush1.msra.mxu0 0.0
        %242 = vmatprep.subr.mxu0 0.0
        %243 = vmatpush1.msra.mxu0 0.0
        %244 = vmatprep.subr.mxu0 0.0
        %245 = vmatpush1.msra.mxu0 0.0
        %246 = vmatprep.subr.mxu0 0.0
        %247 = vmatpush1.msra.mxu0 0.0
        %248 = vmatprep.subr.mxu0 0.0
        %249 = vmatpush1.msra.mxu0 0.0
        %250 = vmatprep.subr.mxu0 0.0
        %251 = vmatpush1.msra.mxu0 0.0
        %252 = vmatprep.subr.mxu0 0.0
        %253 = vmatpush1.msra.mxu0 0.0
        %254 = vmatprep.subr.mxu0 0.0
        %255 = vmatpush1.msra.mxu0 0.0
        %256 = vmatprep.subr.mxu0 0.0
        %257 = vmatpush1.msra.mxu0 0.0
        %258 = vmatprep.subr.mxu0 0.0
        %259 = vmatpush1.msra.mxu0 %v226
        %260 = vmatprep.subr.mxu0 0.0
        %261 = vmatpush2.msra.mxu0 0.0
        %262 = vmatprep.subr.mxu0 0.0
        %263 = vmatpush2.msra.mxu0 0.0
        %264 = vmatprep.subr.mxu0 0.0
        %265 = vmatpush2.msra.mxu0 0.0
        %266 = vmatprep.subr.mxu0 0.0
        %267 = vmatpush2.msra.mxu0 0.0
        %268 = vmatprep.subr.mxu0 0.0
        %269 = vmatpush2.msra.mxu0 0.0
        %270 = vmatprep.subr.mxu0 0.0
        %271 = vmatpush2.msra.mxu0 0.0
        %272 = vmatprep.subr.mxu0 0.0
        %273 = vmatpush2.msra.mxu0 0.0
        %274 = vmatprep.subr.mxu0 0.0
        %275 = vmatpush2.msra.mxu0 0.0
        %276 = vmatprep.subr.mxu0 0.0
        %277 = vmatpush2.msra.mxu0 0.0
        %278 = vmatprep.subr.mxu0 0.0
        %279 = vmatpush2.msra.mxu0 0.0
        %280 = vmatprep.subr.mxu0 0.0
        %281 = vmatpush2.msra.mxu0 0.0
        %282 = vmatprep.subr.mxu0 0.0
        %283 = vmatpush2.msra.mxu0 0.0
        %284 = vmatprep.subr.mxu0 0.0
        %285 = vmatpush2.msra.mxu0 0.0
        %286 = vmatprep.subr.mxu0 0.0
        %287 = vmatpush2.msra.mxu0 0.0
        %288 = vmatprep.subr.mxu0 0.0
        %289 = vmatpush2.msra.mxu0 0.0
        %290 = vmatprep.subr.mxu0 0.0
        %291 = vmatpush2.msra.mxu0 0.0
        %292 = vmatprep.mubr.f32.mxu0 0.0
        %293 = vmatmul.mubr.f32.gmra.mxu0 %v222
        %v294 = vpop.f32.mrf.mxu0
        %v295 = vadd.f32 0.0, %v294
        %v296 = vpop.f32.mrf.mxu0
        %297 = vdwg.mxu0
        %v298 = vld [vmem:[%s2] sm:$0xff]
        %300 = vset.pattern.permute.xlu0 0
        %301 = vperm.xlu0 %300, %v298
        %v302 = vpop.permute.xlu0 %301
        %v304 = vmul.f32 %v295, %v302
        %v305 = vld [vmem:[%s3] sm:$0xff]
        %307 = vset.pattern.permute.xlu0 0
        %308 = vperm.xlu0 %307, %v305
        %v309 = vpop.permute.xlu0 %308
        %v311 = vadd.f32 %v304, %v309
        %v312 = vmul.f32 %v311, 0.5
        %v313 = vmul.f32 %v311, 0.70710677
        %v314 = verf.f32.pop %v313
        %v315 = vadd.f32 %v314, 1.0
        %v316 = vmul.f32 %v312, %v315
        %vm317 = vcmask 130048
        %318 = vst.msk [vmem:[%s210] sm:$0xff] %vm317, %v316
        %s319 = sand.u32 %s131, 1
        %s320 = scalar_lea.sflag [#allocation3], %s319
        %s321 = sand.u32 %s131, 1
        %s322 = smul.addr %s321, 8
        %s323 = scalar_lea.vmem [#allocation2], %s322
        // Predicated region
        $region37: #{fc_bn_gelu1d.3} parent=35 // pred_check
          %p324 = pneg %p141
        $region38: #{fc_bn_gelu1d.3} parent=35 // pred_check_branch
          %326 = sbr.rel (%p324) target = $region40
        $region39: #{fc_bn_gelu1d.3} parent=35 // pred_region
          %s328 = ssub.s32 128, 128
          %329 = vsyncadd %s320, %s328
          %s330 = sadd.s32 %s23, %s22
          %s331 = smul.addr %s330, 128
          %s332 = scalar_lea.hbm %s4, %s331
          %s334 = sshll.u32 %s323, 4
          %s335 = int_to_ptr.vmem [resolvable:$true] %s334
          %337 = dma.vmem_to_hbm [thread:$0]  %s335, 128, %s332, %s320
        $region40: #{fc_bn_gelu1d.3} parent=35 // pred_fallthru
          _
      $region36: #{fc_bn_gelu1d.3} parent=5 // pred_fallthru
        _
      %p338 = scmp.le.s32.totalorder 2, %s13
      // Predicated region
      $region41: #{fc_bn_gelu1d.3} parent=5 // pred_check
        %p339 = pneg %p338
      $region42: #{fc_bn_gelu1d.3} parent=5 // pred_check_branch
        %341 = sbr.rel (%p339) target = $region44
      $region43: #{fc_bn_gelu1d.3} parent=5 // pred_region
        %s342 = ssub.s32 %s13, 2
        // Predicated region
        $region45: #{fc_bn_gelu1d.3} parent=43 // pred_check
          %p343 = pneg %p147
        $region46: #{fc_bn_gelu1d.3} parent=43 // pred_check_branch
          %345 = sbr.rel (%p343) target = $region48
        $region47: #{fc_bn_gelu1d.3} parent=43 // pred_region
          %s346 = sand.u32 %s132, 1
          %s347 = scalar_lea.sflag [#allocation3], %s346
          %s348 = sand.u32 %s132, 1
          %s349 = smul.addr %s348, 8
          %s350 = scalar_lea.vmem [#allocation2], %s349
          %351 = dma.done %s347, 128
        $region48: #{fc_bn_gelu1d.3} parent=43 // pred_fallthru
          _
      $region44: #{fc_bn_gelu1d.3} parent=5 // pred_fallthru
        _
    $region6: #{fc_bn_gelu1d.3} parent=1 // loop_footer
      %s17 = sadd.s32 1, %s13
    $region7: #{fc_bn_gelu1d.3} parent=1 // loop_footer_branch
      %12 = sbr.rel target = $region3
    $region8: #{fc_bn_gelu1d.3} parent=1 // loop_exit
      _
    %352 = vsyncpa [#allocation3], 1
    %s353 = scalar_lea.sflag [#allocation3], 1
    %354 = vsyncpa %s353, 1

</llo_original>
